<compile_context>
chip_gen: v5e
topology: v5e:2x2
jax: 0.10.0
libtpu: 0.0.40
codegen_flags: <defaults>
</compile_context>

<pallas_src>
import jax
import jax.numpy as jnp
from jax.experimental import pallas as pl
from jax.experimental.pallas import tpu as pltpu

HIDDEN = 128


def _round_up(x, m):
    return ((x + m - 1) // m) * m


def _discriminator_kernel(state_ref, action_ref, w1s_ref, w1a_ref, b1_ref,
                          w2_ref, b2_ref, out_ref):
    # fc1: bf16 operands into the MXU, f32 accumulation.
    s = state_ref[...].astype(jnp.bfloat16)           # [TB, S]
    a = action_ref[...].astype(jnp.bfloat16)          # [TB, A]
    h = jnp.dot(s, w1s_ref[...], preferred_element_type=jnp.float32)
    h = h + jnp.dot(a, w1a_ref[...], preferred_element_type=jnp.float32)
    h = jnp.maximum(h + b1_ref[...], 0.0)             # [TB, 128], f32

    # fc2 (128 -> 1): VPU multiply + lane reduction; b2 is an SMEM scalar.
    logits = jnp.sum(h * w2_ref[...], axis=-1) + b2_ref[0]      # [TB]
    # Lane-dense store: [1, TB] slab.
    out_ref[...] = jax.nn.sigmoid(logits)[None, :].astype(out_ref.dtype)


def discriminator_forward(state, action, params, *, block_batch=1024):
    """state: [B, state_dim], action: [B, action_dim] -> [B, 1] float32."""
    w1s, w1a, b1, w2, b2 = params
    B, S = state.shape
    A = action.shape[1]
    H = w1s.shape[1]

    # Batch tile: multiple of 128 (MXU-friendly M), clamped so tiny batches
    # don't waste compute; ~a few hundred KiB of VMEM per tile incl. buffers.
    tb = min(block_batch, _round_up(max(B, 1), 128))
    grid = (pl.cdiv(B, tb),)

    out = pl.pallas_call(
        _discriminator_kernel,
        out_shape=jax.ShapeDtypeStruct((1, B), jnp.float32),
        grid=grid,
        in_specs=[
            pl.BlockSpec((tb, S), lambda i: (i, 0)),   # state   (batch-tiled)
            pl.BlockSpec((tb, A), lambda i: (i, 0)),   # action  (batch-tiled)
            pl.BlockSpec((S, H), lambda i: (0, 0)),    # W1[:S]  (resident)
            pl.BlockSpec((A, H), lambda i: (0, 0)),    # W1[S:]  (resident)
            pl.BlockSpec((1, H), lambda i: (0, 0)),    # b1      (resident)
            pl.BlockSpec((1, H), lambda i: (0, 0)),    # w2 row  (resident)
            pl.BlockSpec(memory_space=pltpu.MemorySpace.SMEM),  # b2 scalar
        ],
        out_specs=pl.BlockSpec((1, tb), lambda i: (0, i)),  # lane-dense output
        compiler_params=pltpu.CompilerParams(
            dimension_semantics=("parallel",),
            vmem_limit_bytes=32 * 1024 * 1024,
        ),
    )(state, action, w1s, w1a, b1, w2, b2)
    return out.reshape(B, 1)


def init_params(key, state_dim, action_dim, hidden=HIDDEN):
    """PyTorch nn.Linear default init (U[-1/sqrt(fan_in), +1/sqrt(fan_in)]).

    Weights are stored transposed ([in, out]); fc1 is split into its state /
    action halves and pre-cast to bf16 once, outside the per-call hot path.
    """
    k1, k2, k3, k4 = jax.random.split(key, 4)
    fan1 = state_dim + action_dim
    bound1 = 1.0 / float(fan1) ** 0.5
    bound2 = 1.0 / float(hidden) ** 0.5
    w1 = jax.random.uniform(k1, (fan1, hidden), jnp.float32, -bound1, bound1)
    b1 = jax.random.uniform(k2, (1, hidden), jnp.float32, -bound1, bound1)
    w2 = jax.random.uniform(k3, (1, hidden), jnp.float32, -bound2, bound2)  # == torch fc2.weight
    b2 = jax.random.uniform(k4, (1,), jnp.float32, -bound2, bound2)          # == torch fc2.bias
    w1s = w1[:state_dim].astype(jnp.bfloat16)
    w1a = w1[state_dim:].astype(jnp.bfloat16)
    return w1s, w1a, b1, w2, b2


if __name__ == "__main__":
    key = jax.random.PRNGKey(0)
    k_s, k_a, k_p = jax.random.split(key, 3)

    batch, state_dim, action_dim = 8, 16, 8
    state = jax.random.normal(k_s, (batch, state_dim), jnp.float32)
    action = jax.random.normal(k_a, (batch, action_dim), jnp.float32)

    params = init_params(k_p, state_dim, action_dim)
    w1s, w1a, b1, w2, b2 = params

    out = discriminator_forward(state, action, params)
    jax.block_until_ready(out)
    assert out.shape == (batch, 1)

    # Reference mirroring the kernel's exact numerics (bf16 matmul operands,
    # f32 accumulate / elementwise).
    h = (jnp.dot(state.astype(jnp.bfloat16), w1s, preferred_element_type=jnp.float32)
         + jnp.dot(action.astype(jnp.bfloat16), w1a, preferred_element_type=jnp.float32))
    h = jnp.maximum(h + b1, 0.0)
    ref = jax.nn.sigmoid(jnp.sum(h * w2, axis=-1, keepdims=True) + b2)
    assert jnp.allclose(out, ref, atol=2e-3), "mismatch vs bf16-operand reference"

    # Loose sanity check vs the f32 PyTorch-equivalent forward (only deviation
    # is bf16 rounding of the 24-term fc1 dot operands).
    cat = jnp.concatenate([state, action], axis=1)
    w1_f32 = jnp.concatenate([w1s.astype(jnp.float32), w1a.astype(jnp.float32)], axis=0)
    ref_f32 = jax.nn.sigmoid(jnp.maximum(cat @ w1_f32 + b1, 0.0) @ w2.T + b2)
    assert jnp.allclose(out, ref_f32, atol=5e-2), "mismatch vs f32 reference"

    print("KERNEL_OK")
</pallas_src>

<mosaic_0001>
module attributes {stable_mosaic.version = 11 : i64} {
  func.func @_discriminator_kernel(%arg0: i32, %arg1: memref<128x16xf32, #tpu.memory_space<vmem>>, %arg2: memref<128x8xf32, #tpu.memory_space<vmem>>, %arg3: memref<16x128xbf16, #tpu.memory_space<vmem>>, %arg4: memref<8x128xbf16, #tpu.memory_space<vmem>>, %arg5: memref<1x128xf32, #tpu.memory_space<vmem>>, %arg6: memref<1x128xf32, #tpu.memory_space<vmem>>, %arg7: memref<1xf32, #tpu.memory_space<smem>>, %arg8: memref<1x128xf32, #tpu.memory_space<vmem>>) attributes {dimension_semantics = [#tpu.dimension_semantics<parallel>], iteration_bounds = array<i64: 1>, scalar_prefetch = 0 : i64, scratch_operands = 0 : i64, tpu.core_type = #tpu.core_type<tc>, window_params = [{transform_indices = @transform_0, window_bounds = array<i64: 128, 16>}, {transform_indices = @transform_1, window_bounds = array<i64: 128, 8>}, {pipeline_mode = #tpu.pipeline_mode<synchronous>, transform_indices = @transform_2, window_bounds = array<i64: 16, 128>}, {pipeline_mode = #tpu.pipeline_mode<synchronous>, transform_indices = @transform_3, window_bounds = array<i64: 8, 128>}, {pipeline_mode = #tpu.pipeline_mode<synchronous>, transform_indices = @transform_4, window_bounds = array<i64: 1, 128>}, {pipeline_mode = #tpu.pipeline_mode<synchronous>, transform_indices = @transform_5, window_bounds = array<i64: 1, 128>}, {transform_indices = @transform_6, window_bounds = array<i64: 1>}, {transform_indices = @transform_7, window_bounds = array<i64: 1, 128>}]} {
    %c0 = arith.constant 0 : index
    %c0_0 = arith.constant 0 : index
    %0 = vector.load %arg1[%c0, %c0_0] : memref<128x16xf32, #tpu.memory_space<vmem>>, vector<128x16xf32>
    %1 = arith.truncf %0 : vector<128x16xf32> to vector<128x16xbf16>
    %c0_1 = arith.constant 0 : index
    %c0_2 = arith.constant 0 : index
    %2 = vector.load %arg2[%c0_1, %c0_2] : memref<128x8xf32, #tpu.memory_space<vmem>>, vector<128x8xf32>
    %3 = arith.truncf %2 : vector<128x8xf32> to vector<128x8xbf16>
    %c0_3 = arith.constant 0 : index
    %c0_4 = arith.constant 0 : index
    %4 = vector.load %arg3[%c0_3, %c0_4] : memref<16x128xbf16, #tpu.memory_space<vmem>>, vector<16x128xbf16>
    %cst = arith.constant dense<0.000000e+00> : vector<128x128xf32>
    %5 = tpu.matmul %1, %4, %cst {dimension_numbers = #tpu.dot_dimension_numbers<[1], [0], [0], [1], [0, 0, 1, 1], [], []>} : vector<128x16xbf16>, vector<16x128xbf16>, vector<128x128xf32> -> vector<128x128xf32>
    %c0_5 = arith.constant 0 : index
    %c0_6 = arith.constant 0 : index
    %6 = vector.load %arg4[%c0_5, %c0_6] : memref<8x128xbf16, #tpu.memory_space<vmem>>, vector<8x128xbf16>
    %cst_7 = arith.constant dense<0.000000e+00> : vector<128x128xf32>
    %7 = tpu.matmul %3, %6, %cst_7 {dimension_numbers = #tpu.dot_dimension_numbers<[1], [0], [0], [1], [0, 0, 1, 1], [], []>} : vector<128x8xbf16>, vector<8x128xbf16>, vector<128x128xf32> -> vector<128x128xf32>
    %8 = arith.addf %5, %7 : vector<128x128xf32>
    %c0_8 = arith.constant 0 : index
    %c0_9 = arith.constant 0 : index
    %9 = vector.load %arg5[%c0_8, %c0_9] : memref<1x128xf32, #tpu.memory_space<vmem>>, vector<1x128xf32>
    %10 = vector.broadcast %9 : vector<1x128xf32> to vector<128x128xf32>
    %11 = arith.addf %8, %10 : vector<128x128xf32>
    %cst_10 = arith.constant 0.000000e+00 : f32
    %12 = vector.broadcast %cst_10 : f32 to vector<128x128xf32>
    %13 = arith.maximumf %11, %12 : vector<128x128xf32>
    %c0_11 = arith.constant 0 : index
    %c0_12 = arith.constant 0 : index
    %14 = vector.load %arg6[%c0_11, %c0_12] : memref<1x128xf32, #tpu.memory_space<vmem>>, vector<1x128xf32>
    %15 = vector.broadcast %14 : vector<1x128xf32> to vector<128x128xf32>
    %16 = arith.mulf %13, %15 : vector<128x128xf32>
    %cst_13 = arith.constant dense<0.000000e+00> : vector<128xf32>
    %17 = vector.multi_reduction <add>, %16, %cst_13 [1] : vector<128x128xf32> to vector<128xf32>
    %c0_14 = arith.constant 0 : index
    %18 = memref.load %arg7[%c0_14] : memref<1xf32, #tpu.memory_space<smem>>
    %19 = vector.broadcast %18 : f32 to vector<128xf32>
    %20 = arith.addf %17, %19 : vector<128xf32>
    %21 = arith.negf %20 : vector<128xf32>
    %22 = math.exp %21 : vector<128xf32>
    %cst_15 = arith.constant 1.000000e+00 : f32
    %23 = vector.broadcast %cst_15 : f32 to vector<128xf32>
    %24 = arith.addf %23, %22 : vector<128xf32>
    %25 = arith.divf %23, %24 : vector<128xf32>
    %26 = vector.shape_cast %25 : vector<128xf32> to vector<1x128xf32>
    %c0_16 = arith.constant 0 : index
    %c0_17 = arith.constant 0 : index
    %27 = vector.load %arg8[%c0_16, %c0_17] : memref<1x128xf32, #tpu.memory_space<vmem>>, vector<1x128xf32>
    tpu.vector_store %arg8[%c0_16, %c0_17], %26 {strides = array<i32>} : memref<1x128xf32, #tpu.memory_space<vmem>>, vector<1x128xf32>,
    return
  }
  func.func @transform_0(%arg0: i32) -> (i32, i32) {
    %c0_i32 = arith.constant 0 : i32
    %c0_i32_0 = arith.constant 0 : i32
    return %arg0, %c0_i32 : i32, i32
  }
  func.func @transform_1(%arg0: i32) -> (i32, i32) {
    %c0_i32 = arith.constant 0 : i32
    %c0_i32_0 = arith.constant 0 : i32
    return %arg0, %c0_i32 : i32, i32
  }
  func.func @transform_2(%arg0: i32) -> (i32, i32) {
    %c0_i32 = arith.constant 0 : i32
    %c0_i32_0 = arith.constant 0 : i32
    %c0_i32_1 = arith.constant 0 : i32
    return %c0_i32, %c0_i32_0 : i32, i32
  }
  func.func @transform_3(%arg0: i32) -> (i32, i32) {
    %c0_i32 = arith.constant 0 : i32
    %c0_i32_0 = arith.constant 0 : i32
    %c0_i32_1 = arith.constant 0 : i32
    return %c0_i32, %c0_i32_0 : i32, i32
  }
  func.func @transform_4(%arg0: i32) -> (i32, i32) {
    %c0_i32 = arith.constant 0 : i32
    %c0_i32_0 = arith.constant 0 : i32
    %c0_i32_1 = arith.constant 0 : i32
    return %c0_i32, %c0_i32_0 : i32, i32
  }
  func.func @transform_5(%arg0: i32) -> (i32, i32) {
    %c0_i32 = arith.constant 0 : i32
    %c0_i32_0 = arith.constant 0 : i32
    %c0_i32_1 = arith.constant 0 : i32
    return %c0_i32, %c0_i32_0 : i32, i32
  }
  func.func @transform_6(%arg0: i32) -> i32 {
    %c0_i32 = arith.constant 0 : i32
    %c0_i32_0 = arith.constant 0 : i32
    return %c0_i32 : i32
  }
  func.func @transform_7(%arg0: i32) -> (i32, i32) {
    %c0_i32 = arith.constant 0 : i32
    %c0_i32_0 = arith.constant 0 : i32
    return %c0_i32, %arg0 : i32, i32
  }
}

</mosaic_0001>

<llo_original>
// kernel: tpu_custom_call.1
$region0: #{tpu_custom_call.1}
  #allocation0 [shape = 'u32[]', space=smem, size = 0x4, offset = 0x4, fixed_abs, tag = 'smem constant byte address 0x4 - core index']
  #allocation1 [shape = 'u32[72,128]{1,0:T(1,128)}', space=vmem, size = 0x9000, scoped, tag = 'internal scratch']
  #allocation2 [shape = 'f32[1]{0:T(128)S(6)}', space=smem, size = 0x200, scoped, tag = 'scoped memory for tpu_custom_call.1']
  %s0 = inlined_call_operand.hbm [shape: f32[8,16], index: 0, kind: input, shape index: {}]
  %s1 = inlined_call_operand.hbm [shape: f32[8,8], index: 1, kind: input, shape index: {}]
  %s2 = inlined_call_operand.hbm [shape: bf16[16,128], index: 2, kind: input, shape index: {}]
  %s3 = inlined_call_operand.vmem [shape: bf16[8,128], index: 3, kind: input, shape index: {}]
  %s4 = inlined_call_operand.vmem [shape: f32[1,128], index: 4, kind: input, shape index: {}]
  %s5 = inlined_call_operand.vmem [shape: f32[1,128], index: 5, kind: input, shape index: {}]
  %s6 = inlined_call_operand.<no memory space> [shape: f32[1], index: 6, kind: input, shape index: {}]
  %s7 = inlined_call_operand.hbm [shape: f32[1,8], index: 7, kind: output, shape index: {}]
  %s8 = sld [smem:[#allocation0]]
  $region50: #{tpu_custom_call.1} parent=0
    _
  %s10 = ssub.s32 1, %s8
  %s11 = scalar_select 0, %s10, %s8
  %12 = sst [smem:[#allocation2]] %s6
  $region1: #{tpu_custom_call.1} parent=0
    #allocation3 [shape = 'u8[65536]{0}', space=vmem, size = 0x10000, scoped, tag = 'input window, operand 0, single buffered']
    #allocation4 [shape = 's32[1]{0}', space=sflag, size = 0x4, scoped, tag = 'scoped memory for tpu_custom_call.1']
    #allocation5 [shape = 's32[1]{0}', space=sflag, size = 0x4, scoped, tag = 'scoped memory for tpu_custom_call.1']
    #allocation6 [shape = 'u8[65536]{0}', space=vmem, size = 0x10000, scoped, tag = 'input window, operand 1, single buffered']
    #allocation7 [shape = 's32[1]{0}', space=sflag, size = 0x4, scoped, tag = 'scoped memory for tpu_custom_call.1']
    #allocation8 [shape = 'u8[4096]{0}', space=vmem, size = 0x1000, scoped, tag = 'input window, operand 2, single buffered']
    #allocation9 [shape = 'u8[512]{0}', space=vmem, size = 0x400, scoped, tag = 'output window, operand 0, single buffered']
    %13 = vsyncpa [#allocation4], 0
    %14 = vsyncpa [#allocation7], 0
    %15 = vsyncpa [#allocation5], 0
    // Predicated region
    $region2: #{tpu_custom_call.1} parent=1 // pred_check
      _
    $region3: #{tpu_custom_call.1} parent=1 // pred_check_branch
      %17 = sbr.rel (0) target = $region5
    $region4: #{tpu_custom_call.1} parent=1 // pred_region
      %19 = vsyncadd [#allocation4], 1920
      %s20 = sshll.u32 %s0, 4
      %s21 = int_to_ptr.hbm [resolvable:$true] %s20
      %s22 = sshll.u32 [#allocation3], 4
      %s23 = int_to_ptr.vmem [resolvable:$true] %s22
      %28 = dma.hbm_to_vmem [thread:$0]  %s21, 128, %s23, [#allocation4], 128, 128, 8
    $region5: #{tpu_custom_call.1} parent=1 // pred_fallthru
      _
    // Predicated region
    $region6: #{tpu_custom_call.1} parent=1 // pred_check
      _
    $region7: #{tpu_custom_call.1} parent=1 // pred_check_branch
      %30 = sbr.rel (0) target = $region9
    $region8: #{tpu_custom_call.1} parent=1 // pred_region
      %32 = vsyncadd [#allocation7], 1920
      %s33 = sshll.u32 %s1, 4
      %s34 = int_to_ptr.hbm [resolvable:$true] %s33
      %s35 = sshll.u32 [#allocation6], 4
      %s36 = int_to_ptr.vmem [resolvable:$true] %s35
      %41 = dma.hbm_to_vmem [thread:$0]  %s34, 128, %s36, [#allocation7], 128, 128, 8
    $region9: #{tpu_custom_call.1} parent=1 // pred_fallthru
      _
    // Predicated region
    $region10: #{tpu_custom_call.1} parent=1 // pred_check
      _
    $region11: #{tpu_custom_call.1} parent=1 // pred_check_branch
      %43 = sbr.rel (0) target = $region13
    $region12: #{tpu_custom_call.1} parent=1 // pred_region
      %45 = vsyncadd [#allocation7], 0
      %s46 = sshll.u32 %s2, 4
      %s47 = int_to_ptr.hbm [resolvable:$true] %s46
      %s48 = sshll.u32 [#allocation8], 4
      %s49 = int_to_ptr.vmem [resolvable:$true] %s48
      %54 = dma.hbm_to_vmem [thread:$0]  %s47, 128, %s49, [#allocation7], 64, 64, 4
    $region13: #{tpu_custom_call.1} parent=1 // pred_fallthru
      _
    // Predicated region
    $region14: #{tpu_custom_call.1} parent=1 // pred_check
      _
    $region15: #{tpu_custom_call.1} parent=1 // pred_check_branch
      %56 = sbr.rel (0) target = $region17
    $region16: #{tpu_custom_call.1} parent=1 // pred_region
      _
    $region17: #{tpu_custom_call.1} parent=1 // pred_fallthru
      _
    // Predicated region
    $region18: #{tpu_custom_call.1} parent=1 // pred_check
      _
    $region19: #{tpu_custom_call.1} parent=1 // pred_check_branch
      %58 = sbr.rel (0) target = $region21
    $region20: #{tpu_custom_call.1} parent=1 // pred_region
      _
    $region21: #{tpu_custom_call.1} parent=1 // pred_fallthru
      _
    // Predicated region
    $region22: #{tpu_custom_call.1} parent=1 // pred_check
      _
    $region23: #{tpu_custom_call.1} parent=1 // pred_check_branch
      %60 = sbr.rel (0) target = $region25
    $region24: #{tpu_custom_call.1} parent=1 // pred_region
      _
    $region25: #{tpu_custom_call.1} parent=1 // pred_fallthru
      _
    // Predicated region
    $region26: #{tpu_custom_call.1} parent=1 // pred_check
      _
    $region27: #{tpu_custom_call.1} parent=1 // pred_check_branch
      %62 = sbr.rel (0) target = $region29
    $region28: #{tpu_custom_call.1} parent=1 // pred_region
      _
    $region29: #{tpu_custom_call.1} parent=1 // pred_fallthru
      _
    // Predicated region
    $region30: #{tpu_custom_call.1} parent=1 // pred_check
      _
    $region31: #{tpu_custom_call.1} parent=1 // pred_check_branch
      %64 = sbr.rel (0) target = $region33
    $region32: #{tpu_custom_call.1} parent=1 // pred_region
      %66 = dma.done [#allocation4], 2048
    $region33: #{tpu_custom_call.1} parent=1 // pred_fallthru
      _
    // Predicated region
    $region34: #{tpu_custom_call.1} parent=1 // pred_check
      _
    $region35: #{tpu_custom_call.1} parent=1 // pred_check_branch
      %68 = sbr.rel (0) target = $region37
    $region36: #{tpu_custom_call.1} parent=1 // pred_region
      %70 = dma.done [#allocation7], 2048
    $region37: #{tpu_custom_call.1} parent=1 // pred_fallthru
      _
    // Predicated region
    $region38: #{tpu_custom_call.1} parent=1 // pred_check
      _
    $region39: #{tpu_custom_call.1} parent=1 // pred_check_branch
      %72 = sbr.rel (0) target = $region41
    $region40: #{tpu_custom_call.1} parent=1 // pred_region
      %74 = dma.done [#allocation7], 128
    $region41: #{tpu_custom_call.1} parent=1 // pred_fallthru
      _
    %v76 = vld [vmem:[#allocation3] sm:$0xff]
    %v77 = vld [vmem:[#allocation3 + $0x8] sm:$0xff]
    %v78 = vld [vmem:[#allocation3 + $0x10] sm:$0xff]
    %v79 = vld [vmem:[#allocation3 + $0x18] sm:$0xff]
    %v80 = vld [vmem:[#allocation3 + $0x20] sm:$0xff]
    %v81 = vld [vmem:[#allocation3 + $0x28] sm:$0xff]
    %v82 = vld [vmem:[#allocation3 + $0x30] sm:$0xff]
    %v83 = vld [vmem:[#allocation3 + $0x38] sm:$0xff]
    %v84 = vld [vmem:[#allocation3 + $0x40] sm:$0xff]
    %v85 = vld [vmem:[#allocation3 + $0x48] sm:$0xff]
    %v86 = vld [vmem:[#allocation3 + $0x50] sm:$0xff]
    %v87 = vld [vmem:[#allocation3 + $0x58] sm:$0xff]
    %v88 = vld [vmem:[#allocation3 + $0x60] sm:$0xff]
    %v89 = vld [vmem:[#allocation3 + $0x68] sm:$0xff]
    %v90 = vld [vmem:[#allocation3 + $0x70] sm:$0xff]
    %v91 = vld [vmem:[#allocation3 + $0x78] sm:$0xff]
    %v92 = vpack.c.bf16 %v77, %v76
    %v93 = vpack.c.bf16 %v79, %v78
    %v94 = vpack.c.bf16 %v81, %v80
    %v95 = vpack.c.bf16 %v83, %v82
    %v96 = vpack.c.bf16 %v85, %v84
    %v97 = vpack.c.bf16 %v87, %v86
    %v98 = vpack.c.bf16 %v89, %v88
    %v99 = vpack.c.bf16 %v91, %v90
    %v100 = vld [vmem:[#allocation6] sm:$0xff]
    %v101 = vld [vmem:[#allocation6 + $0x8] sm:$0xff]
    %v102 = vld [vmem:[#allocation6 + $0x10] sm:$0xff]
    %v103 = vld [vmem:[#allocation6 + $0x18] sm:$0xff]
    %v104 = vld [vmem:[#allocation6 + $0x20] sm:$0xff]
    %v105 = vld [vmem:[#allocation6 + $0x28] sm:$0xff]
    %v106 = vld [vmem:[#allocation6 + $0x30] sm:$0xff]
    %v107 = vld [vmem:[#allocation6 + $0x38] sm:$0xff]
    %v108 = vld [vmem:[#allocation6 + $0x40] sm:$0xff]
    %v109 = vld [vmem:[#allocation6 + $0x48] sm:$0xff]
    %v110 = vld [vmem:[#allocation6 + $0x50] sm:$0xff]
    %v111 = vld [vmem:[#allocation6 + $0x58] sm:$0xff]
    %v112 = vld [vmem:[#allocation6 + $0x60] sm:$0xff]
    %v113 = vld [vmem:[#allocation6 + $0x68] sm:$0xff]
    %v114 = vld [vmem:[#allocation6 + $0x70] sm:$0xff]
    %v115 = vld [vmem:[#allocation6 + $0x78] sm:$0xff]
    %v116 = vpack.c.bf16 %v101, %v100
    %v117 = vpack.c.bf16 %v103, %v102
    %v118 = vpack.c.bf16 %v105, %v104
    %v119 = vpack.c.bf16 %v107, %v106
    %v120 = vpack.c.bf16 %v109, %v108
    %v121 = vpack.c.bf16 %v111, %v110
    %v122 = vpack.c.bf16 %v113, %v112
    %v123 = vpack.c.bf16 %v115, %v114
    %v124 = vld [vmem:[#allocation8] sm:$0xf]
    %v125 = vld [vmem:[#allocation8 + $0x4] sm:$0xf]
    %v126 = vld [vmem:[%s3] sm:$0xf]
    %vm127 = vcmask 64512
    %v129 = vsel %vm127, %v116, 0
    %v132 = vsel %vm127, %v117, 0
    %v135 = vsel %vm127, %v118, 0
    %v138 = vsel %vm127, %v119, 0
    %v141 = vsel %vm127, %v120, 0
    %v144 = vsel %vm127, %v121, 0
    %v147 = vsel %vm127, %v122, 0
    %v150 = vsel %vm127, %v123, 0
    %vm152 = vcmask 1043456
    %v154 = vsel %vm152, %v126, 0
    %156 = vmatpush.bf16.msra.mxu0 0
    %157 = vmatpush.bf16.msra.mxu0 0
    %158 = vmatpush.bf16.msra.mxu0 0
    %159 = vmatpush.bf16.msra.mxu0 0
    %160 = vmatpush.bf16.msra.mxu0 0
    %161 = vmatpush.bf16.msra.mxu0 0
    %162 = vmatpush.bf16.msra.mxu0 0
    %163 = vmatpush.bf16.msra.mxu0 %v154
    %164 = vmatmul.bf16.gmra.mxu0 %v129
    %v165 = vpop.f32.mrf.mxu0
    %v166 = vadd.f32 0.0, %v165
    %v167 = vpop.f32.mrf.mxu0
    %v168 = vadd.f32 0.0, %v167
    %169 = vmatmul.bf16.gmra.mxu0 %v132
    %v170 = vpop.f32.mrf.mxu0
    %v171 = vadd.f32 0.0, %v170
    %v172 = vpop.f32.mrf.mxu0
    %v173 = vadd.f32 0.0, %v172
    %174 = vmatmul.bf16.gmra.mxu0 %v135
    %v175 = vpop.f32.mrf.mxu0
    %v176 = vadd.f32 0.0, %v175
    %v177 = vpop.f32.mrf.mxu0
    %v178 = vadd.f32 0.0, %v177
    %179 = vmatmul.bf16.gmra.mxu0 %v138
    %v180 = vpop.f32.mrf.mxu0
    %v181 = vadd.f32 0.0, %v180
    %v182 = vpop.f32.mrf.mxu0
    %v183 = vadd.f32 0.0, %v182
    %184 = vmatmul.bf16.gmra.mxu0 %v141
    %v185 = vpop.f32.mrf.mxu0
    %v186 = vadd.f32 0.0, %v185
    %v187 = vpop.f32.mrf.mxu0
    %v188 = vadd.f32 0.0, %v187
    %189 = vmatmul.bf16.gmra.mxu0 %v144
    %v190 = vpop.f32.mrf.mxu0
    %v191 = vadd.f32 0.0, %v190
    %v192 = vpop.f32.mrf.mxu0
    %v193 = vadd.f32 0.0, %v192
    %194 = vmatmul.bf16.gmra.mxu0 %v147
    %v195 = vpop.f32.mrf.mxu0
    %v196 = vadd.f32 0.0, %v195
    %v197 = vpop.f32.mrf.mxu0
    %v198 = vadd.f32 0.0, %v197
    %199 = vmatmul.bf16.gmra.mxu0 %v150
    %v200 = vpop.f32.mrf.mxu0
    %v201 = vadd.f32 0.0, %v200
    %v202 = vpop.f32.mrf.mxu0
    %v203 = vadd.f32 0.0, %v202
    %204 = vdwg.mxu0
    %v207 = vunpack.c.l.b16 %v124
    %v208 = vunpack.c.l.b16 %v125
    %v209 = vpack.c.b16 %v208, %v207
    %vm211 = vcmask 130048
    %v213 = vsel %vm211, %v92, 0
    %v216 = vsel %vm211, %v93, 0
    %v219 = vsel %vm211, %v94, 0
    %v222 = vsel %vm211, %v95, 0
    %v225 = vsel %vm211, %v96, 0
    %v228 = vsel %vm211, %v97, 0
    %v231 = vsel %vm211, %v98, 0
    %v234 = vsel %vm211, %v99, 0
    %236 = vmatpush.bf16.msra.mxu0 0
    %237 = vmatpush.bf16.msra.mxu0 0
    %238 = vmatpush.bf16.msra.mxu0 0
    %239 = vmatpush.bf16.msra.mxu0 0
    %240 = vmatpush.bf16.msra.mxu0 0
    %241 = vmatpush.bf16.msra.mxu0 0
    %242 = vmatpush.bf16.msra.mxu0 0
    %243 = vmatpush.bf16.msra.mxu0 %v209
    %244 = vmatmul.bf16.gmra.mxu0 %v213
    %v245 = vpop.f32.mrf.mxu0
    %v246 = vadd.f32 %v166, %v245
    %v247 = vpop.f32.mrf.mxu0
    %v248 = vadd.f32 %v168, %v247
    %249 = vmatmul.bf16.gmra.mxu0 %v216
    %v250 = vpop.f32.mrf.mxu0
    %v251 = vadd.f32 %v171, %v250
    %v252 = vpop.f32.mrf.mxu0
    %v253 = vadd.f32 %v173, %v252
    %254 = vmatmul.bf16.gmra.mxu0 %v219
    %v255 = vpop.f32.mrf.mxu0
    %v256 = vadd.f32 %v176, %v255
    %v257 = vpop.f32.mrf.mxu0
    %v258 = vadd.f32 %v178, %v257
    %259 = vmatmul.bf16.gmra.mxu0 %v222
    %v260 = vpop.f32.mrf.mxu0
    %v261 = vadd.f32 %v181, %v260
    %v262 = vpop.f32.mrf.mxu0
    %v263 = vadd.f32 %v183, %v262
    %264 = vmatmul.bf16.gmra.mxu0 %v225
    %v265 = vpop.f32.mrf.mxu0
    %v266 = vadd.f32 %v186, %v265
    %v267 = vpop.f32.mrf.mxu0
    %v268 = vadd.f32 %v188, %v267
    %269 = vmatmul.bf16.gmra.mxu0 %v228
    %v270 = vpop.f32.mrf.mxu0
    %v271 = vadd.f32 %v191, %v270
    %v272 = vpop.f32.mrf.mxu0
    %v273 = vadd.f32 %v193, %v272
    %274 = vmatmul.bf16.gmra.mxu0 %v231
    %v275 = vpop.f32.mrf.mxu0
    %v276 = vadd.f32 %v196, %v275
    %v277 = vpop.f32.mrf.mxu0
    %v278 = vadd.f32 %v198, %v277
    %279 = vmatmul.bf16.gmra.mxu0 %v234
    %v280 = vpop.f32.mrf.mxu0
    %v281 = vadd.f32 %v201, %v280
    %v282 = vpop.f32.mrf.mxu0
    %v283 = vadd.f32 %v203, %v282
    %284 = vdwg.mxu0
    %v285 = vld [vmem:[%s4] sm:$0x1]
    %v287 = vperm.slane %v285, 0
    %v289 = vadd.f32 %v246, %v287
    %v290 = vadd.f32 %v248, %v287
    %v291 = vadd.f32 %v251, %v287
    %v292 = vadd.f32 %v253, %v287
    %v293 = vadd.f32 %v256, %v287
    %v294 = vadd.f32 %v258, %v287
    %v295 = vadd.f32 %v261, %v287
    %v296 = vadd.f32 %v263, %v287
    %v297 = vadd.f32 %v266, %v287
    %v298 = vadd.f32 %v268, %v287
    %v299 = vadd.f32 %v271, %v287
    %v300 = vadd.f32 %v273, %v287
    %v301 = vadd.f32 %v276, %v287
    %v302 = vadd.f32 %v278, %v287
    %v303 = vadd.f32 %v281, %v287
    %v304 = vadd.f32 %v283, %v287
    %v305 = vmax.f32 %v289, 0.0
    %v306 = vmax.f32 %v290, 0.0
    %v307 = vmax.f32 %v291, 0.0
    %v308 = vmax.f32 %v292, 0.0
    %v309 = vmax.f32 %v293, 0.0
    %v310 = vmax.f32 %v294, 0.0
    %v311 = vmax.f32 %v295, 0.0
    %v312 = vmax.f32 %v296, 0.0
    %v313 = vmax.f32 %v297, 0.0
    %v314 = vmax.f32 %v298, 0.0
    %v315 = vmax.f32 %v299, 0.0
    %v316 = vmax.f32 %v300, 0.0
    %v317 = vmax.f32 %v301, 0.0
    %v318 = vmax.f32 %v302, 0.0
    %v319 = vmax.f32 %v303, 0.0
    %v320 = vmax.f32 %v304, 0.0
    %v321 = vld [vmem:[%s5] sm:$0x1]
    %v323 = vperm.slane %v321, 0
    %v325 = vmul.f32 %v305, %v323
    %v326 = vmul.f32 %v306, %v323
    %v327 = vmul.f32 %v307, %v323
    %v328 = vmul.f32 %v308, %v323
    %v329 = vmul.f32 %v309, %v323
    %v330 = vmul.f32 %v310, %v323
    %v331 = vmul.f32 %v311, %v323
    %v332 = vmul.f32 %v312, %v323
    %v333 = vmul.f32 %v313, %v323
    %v334 = vmul.f32 %v314, %v323
    %v335 = vmul.f32 %v315, %v323
    %v336 = vmul.f32 %v316, %v323
    %v337 = vmul.f32 %v317, %v323
    %v338 = vmul.f32 %v318, %v323
    %v339 = vmul.f32 %v319, %v323
    %v340 = vmul.f32 %v320, %v323
    %341 = vadd.xlane.f32.xlu0 %v325
    %v342 = vpop.xlane.xlu0 %341
    %343 = vadd.xlane.f32.xlu0 %v326
    %v344 = vpop.xlane.xlu0 %343
    %345 = vadd.xlane.f32.xlu0 %v327
    %v346 = vpop.xlane.xlu0 %345
    %347 = vadd.xlane.f32.xlu0 %v328
    %v348 = vpop.xlane.xlu0 %347
    %349 = vadd.xlane.f32.xlu0 %v329
    %v350 = vpop.xlane.xlu0 %349
    %351 = vadd.xlane.f32.xlu0 %v330
    %v352 = vpop.xlane.xlu0 %351
    %353 = vadd.xlane.f32.xlu0 %v331
    %v354 = vpop.xlane.xlu0 %353
    %355 = vadd.xlane.f32.xlu0 %v332
    %v356 = vpop.xlane.xlu0 %355
    %357 = vadd.xlane.f32.xlu0 %v333
    %v358 = vpop.xlane.xlu0 %357
    %359 = vadd.xlane.f32.xlu0 %v334
    %v360 = vpop.xlane.xlu0 %359
    %361 = vadd.xlane.f32.xlu0 %v335
    %v362 = vpop.xlane.xlu0 %361
    %363 = vadd.xlane.f32.xlu0 %v336
    %v364 = vpop.xlane.xlu0 %363
    %365 = vadd.xlane.f32.xlu0 %v337
    %v366 = vpop.xlane.xlu0 %365
    %367 = vadd.xlane.f32.xlu0 %v338
    %v368 = vpop.xlane.xlu0 %367
    %369 = vadd.xlane.f32.xlu0 %v339
    %v370 = vpop.xlane.xlu0 %369
    %371 = vadd.xlane.f32.xlu0 %v340
    %v372 = vpop.xlane.xlu0 %371
    %s373 = sld [smem:[#allocation2]]
    %v374 = vstv %s373
    %v375 = vadd.f32 %v342, %v374
    %v376 = vadd.f32 %v344, %v374
    %v377 = vadd.f32 %v346, %v374
    %v378 = vadd.f32 %v348, %v374
    %v379 = vadd.f32 %v350, %v374
    %v380 = vadd.f32 %v352, %v374
    %v381 = vadd.f32 %v354, %v374
    %v382 = vadd.f32 %v356, %v374
    %v383 = vadd.f32 %v358, %v374
    %v384 = vadd.f32 %v360, %v374
    %v385 = vadd.f32 %v362, %v374
    %v386 = vadd.f32 %v364, %v374
    %v387 = vadd.f32 %v366, %v374
    %v388 = vadd.f32 %v368, %v374
    %v389 = vadd.f32 %v370, %v374
    %v390 = vadd.f32 %v372, %v374
    %v391 = vxor.u32 %v375, 2147483648
    %v392 = vxor.u32 %v376, 2147483648
    %v393 = vxor.u32 %v377, 2147483648
    %v394 = vxor.u32 %v378, 2147483648
    %v395 = vxor.u32 %v379, 2147483648
    %v396 = vxor.u32 %v380, 2147483648
    %v397 = vxor.u32 %v381, 2147483648
    %v398 = vxor.u32 %v382, 2147483648
    %v399 = vxor.u32 %v383, 2147483648
    %v400 = vxor.u32 %v384, 2147483648
    %v401 = vxor.u32 %v385, 2147483648
    %v402 = vxor.u32 %v386, 2147483648
    %v403 = vxor.u32 %v387, 2147483648
    %v404 = vxor.u32 %v388, 2147483648
    %v405 = vxor.u32 %v389, 2147483648
    %v406 = vxor.u32 %v390, 2147483648
    %v407 = vmul.f32 %v391, 1.442695
    %v408 = vpow.pop %v407
    %v409 = vmul.f32 %v392, 1.442695
    %v410 = vpow.pop %v409
    %v411 = vmul.f32 %v393, 1.442695
    %v412 = vpow.pop %v411
    %v413 = vmul.f32 %v394, 1.442695
    %v414 = vpow.pop %v413
    %v415 = vmul.f32 %v395, 1.442695
    %v416 = vpow.pop %v415
    %v417 = vmul.f32 %v396, 1.442695
    %v418 = vpow.pop %v417
    %v419 = vmul.f32 %v397, 1.442695
    %v420 = vpow.pop %v419
    %v421 = vmul.f32 %v398, 1.442695
    %v422 = vpow.pop %v421
    %v423 = vmul.f32 %v399, 1.442695
    %v424 = vpow.pop %v423
    %v425 = vmul.f32 %v400, 1.442695
    %v426 = vpow.pop %v425
    %v427 = vmul.f32 %v401, 1.442695
    %v428 = vpow.pop %v427
    %v429 = vmul.f32 %v402, 1.442695
    %v430 = vpow.pop %v429
    %v431 = vmul.f32 %v403, 1.442695
    %v432 = vpow.pop %v431
    %v433 = vmul.f32 %v404, 1.442695
    %v434 = vpow.pop %v433
    %v435 = vmul.f32 %v405, 1.442695
    %v436 = vpow.pop %v435
    %v437 = vmul.f32 %v406, 1.442695
    %v438 = vpow.pop %v437
    %v439 = vadd.f32 %v408, 1.0
    %v440 = vadd.f32 %v410, 1.0
    %v441 = vadd.f32 %v412, 1.0
    %v442 = vadd.f32 %v414, 1.0
    %v443 = vadd.f32 %v416, 1.0
    %v444 = vadd.f32 %v418, 1.0
    %v445 = vadd.f32 %v420, 1.0
    %v446 = vadd.f32 %v422, 1.0
    %v447 = vadd.f32 %v424, 1.0
    %v448 = vadd.f32 %v426, 1.0
    %v449 = vadd.f32 %v428, 1.0
    %v450 = vadd.f32 %v430, 1.0
    %v451 = vadd.f32 %v432, 1.0
    %v452 = vadd.f32 %v434, 1.0
    %v453 = vadd.f32 %v436, 1.0
    %v454 = vadd.f32 %v438, 1.0
    %v455 = vrcp.pop %v439
    %v456 = vmul.f32 %v439, %v455
    %v457 = vsub.f32 1.0, %v456
    %v458 = vmul.f32 %v455, %v457
    %v459 = vadd.f32 %v455, %v458
    %vm460 = vweird.f32 %v439
    %vm461 = vweird.f32 %v455
    %vm462 = vmor %vm460, %vm461
    %v463 = vsel %vm462, %v455, %v459
    %v464 = vand.u32 2147483647, %v439
    %vm465 = vcmp.eq.f32.partialorder %v464, 8.507059e+37
    %v466 = vand.u32 %v439, 2147483648
    %v467 = vor.u32 1.1754944e-38, %v466
    %v468 = vsel %vm465, %v467, %v463
    %v469 = vmul.f32 1.0, %v468
    %v470 = vrcp.pop %v440
    %v471 = vmul.f32 %v440, %v470
    %v472 = vsub.f32 1.0, %v471
    %v473 = vmul.f32 %v470, %v472
    %v474 = vadd.f32 %v470, %v473
    %vm475 = vweird.f32 %v440
    %vm476 = vweird.f32 %v470
    %vm477 = vmor %vm475, %vm476
    %v478 = vsel %vm477, %v470, %v474
    %v479 = vand.u32 2147483647, %v440
    %vm480 = vcmp.eq.f32.partialorder %v479, 8.507059e+37
    %v481 = vand.u32 %v440, 2147483648
    %v482 = vor.u32 1.1754944e-38, %v481
    %v483 = vsel %vm480, %v482, %v478
    %v484 = vmul.f32 1.0, %v483
    %v485 = vrcp.pop %v441
    %v486 = vmul.f32 %v441, %v485
    %v487 = vsub.f32 1.0, %v486
    %v488 = vmul.f32 %v485, %v487
    %v489 = vadd.f32 %v485, %v488
    %vm490 = vweird.f32 %v441
    %vm491 = vweird.f32 %v485
    %vm492 = vmor %vm490, %vm491
    %v493 = vsel %vm492, %v485, %v489
    %v494 = vand.u32 2147483647, %v441
    %vm495 = vcmp.eq.f32.partialorder %v494, 8.507059e+37
    %v496 = vand.u32 %v441, 2147483648
    %v497 = vor.u32 1.1754944e-38, %v496
    %v498 = vsel %vm495, %v497, %v493
    %v499 = vmul.f32 1.0, %v498
    %v500 = vrcp.pop %v442
    %v501 = vmul.f32 %v442, %v500
    %v502 = vsub.f32 1.0, %v501
    %v503 = vmul.f32 %v500, %v502
    %v504 = vadd.f32 %v500, %v503
    %vm505 = vweird.f32 %v442
    %vm506 = vweird.f32 %v500
    %vm507 = vmor %vm505, %vm506
    %v508 = vsel %vm507, %v500, %v504
    %v509 = vand.u32 2147483647, %v442
    %vm510 = vcmp.eq.f32.partialorder %v509, 8.507059e+37
    %v511 = vand.u32 %v442, 2147483648
    %v512 = vor.u32 1.1754944e-38, %v511
    %v513 = vsel %vm510, %v512, %v508
    %v514 = vmul.f32 1.0, %v513
    %v515 = vrcp.pop %v443
    %v516 = vmul.f32 %v443, %v515
    %v517 = vsub.f32 1.0, %v516
    %v518 = vmul.f32 %v515, %v517
    %v519 = vadd.f32 %v515, %v518
    %vm520 = vweird.f32 %v443
    %vm521 = vweird.f32 %v515
    %vm522 = vmor %vm520, %vm521
    %v523 = vsel %vm522, %v515, %v519
    %v524 = vand.u32 2147483647, %v443
    %vm525 = vcmp.eq.f32.partialorder %v524, 8.507059e+37
    %v526 = vand.u32 %v443, 2147483648
    %v527 = vor.u32 1.1754944e-38, %v526
    %v528 = vsel %vm525, %v527, %v523
    %v529 = vmul.f32 1.0, %v528
    %v530 = vrcp.pop %v444
    %v531 = vmul.f32 %v444, %v530
    %v532 = vsub.f32 1.0, %v531
    %v533 = vmul.f32 %v530, %v532
    %v534 = vadd.f32 %v530, %v533
    %vm535 = vweird.f32 %v444
    %vm536 = vweird.f32 %v530
    %vm537 = vmor %vm535, %vm536
    %v538 = vsel %vm537, %v530, %v534
    %v539 = vand.u32 2147483647, %v444
    %vm540 = vcmp.eq.f32.partialorder %v539, 8.507059e+37
    %v541 = vand.u32 %v444, 2147483648
    %v542 = vor.u32 1.1754944e-38, %v541
    %v543 = vsel %vm540, %v542, %v538
    %v544 = vmul.f32 1.0, %v543
    %v545 = vrcp.pop %v445
    %v546 = vmul.f32 %v445, %v545
    %v547 = vsub.f32 1.0, %v546
    %v548 = vmul.f32 %v545, %v547
    %v549 = vadd.f32 %v545, %v548
    %vm550 = vweird.f32 %v445
    %vm551 = vweird.f32 %v545
    %vm552 = vmor %vm550, %vm551
    %v553 = vsel %vm552, %v545, %v549
    %v554 = vand.u32 2147483647, %v445
    %vm555 = vcmp.eq.f32.partialorder %v554, 8.507059e+37
    %v556 = vand.u32 %v445, 2147483648
    %v557 = vor.u32 1.1754944e-38, %v556
    %v558 = vsel %vm555, %v557, %v553
    %v559 = vmul.f32 1.0, %v558
    %v560 = vrcp.pop %v446
    %v561 = vmul.f32 %v446, %v560
    %v562 = vsub.f32 1.0, %v561
    %v563 = vmul.f32 %v560, %v562
    %v564 = vadd.f32 %v560, %v563
    %vm565 = vweird.f32 %v446
    %vm566 = vweird.f32 %v560
    %vm567 = vmor %vm565, %vm566
    %v568 = vsel %vm567, %v560, %v564
    %v569 = vand.u32 2147483647, %v446
    %vm570 = vcmp.eq.f32.partialorder %v569, 8.507059e+37
    %v571 = vand.u32 %v446, 2147483648
    %v572 = vor.u32 1.1754944e-38, %v571
    %v573 = vsel %vm570, %v572, %v568
    %v574 = vmul.f32 1.0, %v573
    %v575 = vrcp.pop %v447
    %v576 = vmul.f32 %v447, %v575
    %v577 = vsub.f32 1.0, %v576
    %v578 = vmul.f32 %v575, %v577
    %v579 = vadd.f32 %v575, %v578
    %vm580 = vweird.f32 %v447
    %vm581 = vweird.f32 %v575
    %vm582 = vmor %vm580, %vm581
    %v583 = vsel %vm582, %v575, %v579
    %v584 = vand.u32 2147483647, %v447
    %vm585 = vcmp.eq.f32.partialorder %v584, 8.507059e+37
    %v586 = vand.u32 %v447, 2147483648
    %v587 = vor.u32 1.1754944e-38, %v586
    %v588 = vsel %vm585, %v587, %v583
    %v589 = vmul.f32 1.0, %v588
    %v590 = vrcp.pop %v448
    %v591 = vmul.f32 %v448, %v590
    %v592 = vsub.f32 1.0, %v591
    %v593 = vmul.f32 %v590, %v592
    %v594 = vadd.f32 %v590, %v593
    %vm595 = vweird.f32 %v448
    %vm596 = vweird.f32 %v590
    %vm597 = vmor %vm595, %vm596
    %v598 = vsel %vm597, %v590, %v594
    %v599 = vand.u32 2147483647, %v448
    %vm600 = vcmp.eq.f32.partialorder %v599, 8.507059e+37
    %v601 = vand.u32 %v448, 2147483648
    %v602 = vor.u32 1.1754944e-38, %v601
    %v603 = vsel %vm600, %v602, %v598
    %v604 = vmul.f32 1.0, %v603
    %v605 = vrcp.pop %v449
    %v606 = vmul.f32 %v449, %v605
    %v607 = vsub.f32 1.0, %v606
    %v608 = vmul.f32 %v605, %v607
    %v609 = vadd.f32 %v605, %v608
    %vm610 = vweird.f32 %v449
    %vm611 = vweird.f32 %v605
    %vm612 = vmor %vm610, %vm611
    %v613 = vsel %vm612, %v605, %v609
    %v614 = vand.u32 2147483647, %v449
    %vm615 = vcmp.eq.f32.partialorder %v614, 8.507059e+37
    %v616 = vand.u32 %v449, 2147483648
    %v617 = vor.u32 1.1754944e-38, %v616
    %v618 = vsel %vm615, %v617, %v613
    %v619 = vmul.f32 1.0, %v618
    %v620 = vrcp.pop %v450
    %v621 = vmul.f32 %v450, %v620
    %v622 = vsub.f32 1.0, %v621
    %v623 = vmul.f32 %v620, %v622
    %v624 = vadd.f32 %v620, %v623
    %vm625 = vweird.f32 %v450
    %vm626 = vweird.f32 %v620
    %vm627 = vmor %vm625, %vm626
    %v628 = vsel %vm627, %v620, %v624
    %v629 = vand.u32 2147483647, %v450
    %vm630 = vcmp.eq.f32.partialorder %v629, 8.507059e+37
    %v631 = vand.u32 %v450, 2147483648
    %v632 = vor.u32 1.1754944e-38, %v631
    %v633 = vsel %vm630, %v632, %v628
    %v634 = vmul.f32 1.0, %v633
    %v635 = vrcp.pop %v451
    %v636 = vmul.f32 %v451, %v635
    %v637 = vsub.f32 1.0, %v636
    %v638 = vmul.f32 %v635, %v637
    %v639 = vadd.f32 %v635, %v638
    %vm640 = vweird.f32 %v451
    %vm641 = vweird.f32 %v635
    %vm642 = vmor %vm640, %vm641
    %v643 = vsel %vm642, %v635, %v639
    %v644 = vand.u32 2147483647, %v451
    %vm645 = vcmp.eq.f32.partialorder %v644, 8.507059e+37
    %v646 = vand.u32 %v451, 2147483648
    %v647 = vor.u32 1.1754944e-38, %v646
    %v648 = vsel %vm645, %v647, %v643
    %v649 = vmul.f32 1.0, %v648
    %v650 = vrcp.pop %v452
    %v651 = vmul.f32 %v452, %v650
    %v652 = vsub.f32 1.0, %v651
    %v653 = vmul.f32 %v650, %v652
    %v654 = vadd.f32 %v650, %v653
    %vm655 = vweird.f32 %v452
    %vm656 = vweird.f32 %v650
    %vm657 = vmor %vm655, %vm656
    %v658 = vsel %vm657, %v650, %v654
    %v659 = vand.u32 2147483647, %v452
    %vm660 = vcmp.eq.f32.partialorder %v659, 8.507059e+37
    %v661 = vand.u32 %v452, 2147483648
    %v662 = vor.u32 1.1754944e-38, %v661
    %v663 = vsel %vm660, %v662, %v658
    %v664 = vmul.f32 1.0, %v663
    %v665 = vrcp.pop %v453
    %v666 = vmul.f32 %v453, %v665
    %v667 = vsub.f32 1.0, %v666
    %v668 = vmul.f32 %v665, %v667
    %v669 = vadd.f32 %v665, %v668
    %vm670 = vweird.f32 %v453
    %vm671 = vweird.f32 %v665
    %vm672 = vmor %vm670, %vm671
    %v673 = vsel %vm672, %v665, %v669
    %v674 = vand.u32 2147483647, %v453
    %vm675 = vcmp.eq.f32.partialorder %v674, 8.507059e+37
    %v676 = vand.u32 %v453, 2147483648
    %v677 = vor.u32 1.1754944e-38, %v676
    %v678 = vsel %vm675, %v677, %v673
    %v679 = vmul.f32 1.0, %v678
    %v680 = vrcp.pop %v454
    %v681 = vmul.f32 %v454, %v680
    %v682 = vsub.f32 1.0, %v681
    %v683 = vmul.f32 %v680, %v682
    %v684 = vadd.f32 %v680, %v683
    %vm685 = vweird.f32 %v454
    %vm686 = vweird.f32 %v680
    %vm687 = vmor %vm685, %vm686
    %v688 = vsel %vm687, %v680, %v684
    %v689 = vand.u32 2147483647, %v454
    %vm690 = vcmp.eq.f32.partialorder %v689, 8.507059e+37
    %v691 = vand.u32 %v454, 2147483648
    %v692 = vor.u32 1.1754944e-38, %v691
    %v693 = vsel %vm690, %v692, %v688
    %v694 = vmul.f32 1.0, %v693
    %v711 = vlaneseq
    %v712 = vand.u32 %v711, 127
    %v713 = vperm.slane %v469, %v712
    %v714 = vadd.s32 %v712, 4294967288
    %v715 = vperm.slane %v484, %v714
    %vm716 = vcmask 130112
    %v717 = vsel %vm716, %v715, %v713
    %v718 = vadd.s32 %v712, 4294967280
    %v719 = vperm.slane %v499, %v718
    %vm720 = vcmask 195712
    %v721 = vsel %vm720, %v719, %v717
    %v722 = vadd.s32 %v712, 4294967272
    %v723 = vperm.slane %v514, %v722
    %vm724 = vcmask 261312
    %v725 = vsel %vm724, %v723, %v721
    %v726 = vadd.s32 %v712, 4294967264
    %v727 = vperm.slane %v529, %v726
    %vm728 = vcmask 326912
    %v729 = vsel %vm728, %v727, %v725
    %v730 = vadd.s32 %v712, 4294967256
    %v731 = vperm.slane %v544, %v730
    %vm732 = vcmask 392512
    %v733 = vsel %vm732, %v731, %v729
    %v734 = vadd.s32 %v712, 4294967248
    %v735 = vperm.slane %v559, %v734
    %vm736 = vcmask 458112
    %v737 = vsel %vm736, %v735, %v733
    %v738 = vadd.s32 %v712, 4294967240
    %v739 = vperm.slane %v574, %v738
    %vm740 = vcmask 523712
    %v741 = vsel %vm740, %v739, %v737
    %v742 = vadd.s32 %v712, 4294967232
    %v743 = vperm.slane %v589, %v742
    %vm744 = vcmask 589312
    %v745 = vsel %vm744, %v743, %v741
    %v746 = vadd.s32 %v712, 4294967224
    %v747 = vperm.slane %v604, %v746
    %vm748 = vcmask 654912
    %v749 = vsel %vm748, %v747, %v745
    %v750 = vadd.s32 %v712, 4294967216
    %v751 = vperm.slane %v619, %v750
    %vm752 = vcmask 720512
    %v753 = vsel %vm752, %v751, %v749
    %v754 = vadd.s32 %v712, 4294967208
    %v755 = vperm.slane %v634, %v754
    %vm756 = vcmask 786112
    %v757 = vsel %vm756, %v755, %v753
    %v758 = vadd.s32 %v712, 4294967200
    %v759 = vperm.slane %v649, %v758
    %vm760 = vcmask 851712
    %v761 = vsel %vm760, %v759, %v757
    %v762 = vadd.s32 %v712, 4294967192
    %v763 = vperm.slane %v664, %v762
    %vm764 = vcmask 917312
    %v765 = vsel %vm764, %v763, %v761
    %v766 = vadd.s32 %v712, 4294967184
    %v767 = vperm.slane %v679, %v766
    %vm768 = vcmask 982912
    %v769 = vsel %vm768, %v767, %v765
    %v770 = vadd.s32 %v712, 4294967176
    %v771 = vperm.slane %v694, %v770
    %vm772 = vcmask 1048512
    %v773 = vsel %vm772, %v771, %v769
    %775 = vst [vmem:[#allocation9] sm:$0x1] %v773
    // Predicated region
    $region42: #{tpu_custom_call.1} parent=1 // pred_check
      _
    $region43: #{tpu_custom_call.1} parent=1 // pred_check_branch
      %777 = sbr.rel (0) target = $region45
    $region44: #{tpu_custom_call.1} parent=1 // pred_region
      %779 = vsyncadd [#allocation5], 0
      %s781 = sshll.u32 [#allocation9], 4
      %s782 = int_to_ptr.vmem [resolvable:$true] %s781
      %s783 = sshll.u32 %s7, 4
      %s784 = int_to_ptr.hbm [resolvable:$true] %s783
      %786 = dma.vmem_to_hbm [thread:$0]  %s782, 16, %s784, [#allocation5]
    $region45: #{tpu_custom_call.1} parent=1 // pred_fallthru
      _
    // Predicated region
    $region46: #{tpu_custom_call.1} parent=1 // pred_check
      _
    $region47: #{tpu_custom_call.1} parent=1 // pred_check_branch
      %788 = sbr.rel (0) target = $region49
    $region48: #{tpu_custom_call.1} parent=1 // pred_region
      %790 = dma.done [#allocation5], 16
    $region49: #{tpu_custom_call.1} parent=1 // pred_fallthru
      _
    %791 = vsyncpa [#allocation4], 1
    %792 = vsyncpa [#allocation7], 1
    %793 = vsyncpa [#allocation5], 1

</llo_original>
